<compile_context>
chip_gen: v6e
topology: v6e:2x2x1
jax: 0.10.0
libtpu: 0.0.40
codegen_flags: <defaults>
</compile_context>

<pallas_src>
import jax
import jax.numpy as jnp
from jax.experimental import pallas as pl
from jax.experimental.pallas import tpu as pltpu


def mlp_kernel(x_ref, w1_ref, b1_ref, w2_ref, b2_ref, w3_ref, b3_ref, o_ref):
    # (tile_b, 14) -> (14, tile_b): batch lives on the lane axis from here on.
    xt = x_ref[...].T                                                   # XLU

    # layer1 + relu : (8,14) @ (14,tile_b) -> (8, tile_b)
    h1 = jnp.dot(w1_ref[...], xt, preferred_element_type=jnp.float32)
    h1 = jnp.maximum(h1 + b1_ref[...], 0.0)

    # layer2 + relu : (6,8) @ (8,tile_b) -> (6, tile_b)
    h2 = jnp.dot(w2_ref[...], h1, preferred_element_type=jnp.float32)
    h2 = jnp.maximum(h2 + b2_ref[...], 0.0)

    # layer3 + sigmoid : (1,6) @ (6,tile_b) -> (1, tile_b)   (lane-dense out)
    z = jnp.dot(w3_ref[...], h2, preferred_element_type=jnp.float32)
    o_ref[...] = jax.nn.sigmoid(z + b3_ref[...]).astype(o_ref.dtype)


def mlp_forward(x, params, *, tile_b=8192):
    """x: (batch, 14) f32. Returns (batch, 1) f32 = sigmoid(MLP(x))."""
    w1, b1, w2, b2, w3, b3 = params
    batch, d_in = x.shape
    assert d_in == w1.shape[0]

    # Feature-major weight/bias layouts (tiny one-time ops).
    w1t, w2t, w3t = w1.T, w2.T, w3.T                        # (8,14) (6,8) (1,6)
    b1c, b2c, b3c = (b.reshape(-1, 1) for b in (b1, b2, b3))  # (out, 1)

    # Tile selection: always a multiple of 128 (lane alignment for the
    # transposed activations and the (1, tile_b) output block).
    batch_up = ((batch + 127) // 128) * 128
    tile_b = ((max(int(tile_b), 1) + 127) // 128) * 128
    tile_b = min(tile_b, batch_up)
    padded = pl.cdiv(batch, tile_b) * tile_b
    if padded != batch:
        x = jnp.pad(x, ((0, padded - batch), (0, 0)))

    grid = (padded // tile_b,)
    resident = lambda a: pl.BlockSpec(a.shape, lambda i: (0, 0))

    out = pl.pallas_call(
        mlp_kernel,
        out_shape=jax.ShapeDtypeStruct((1, padded), jnp.float32),
        grid=grid,
        in_specs=[
            pl.BlockSpec((tile_b, d_in), lambda i: (i, 0)),   # x rows: streamed
            resident(w1t), resident(b1c),                     # weights: resident
            resident(w2t), resident(b2c),
            resident(w3t), resident(b3c),
        ],
        out_specs=pl.BlockSpec((1, tile_b), lambda i: (0, i)),
        compiler_params=pltpu.CompilerParams(
            dimension_semantics=("parallel",)),
    )(x, w1t, b1c, w2t, b2c, w3t, b3c)

    return out[0, :batch].reshape(batch, 1)


def init_params(key):
    """Deterministic init mimicking torch.nn.Linear default (uniform +/- 1/sqrt(fan_in)).

    Weights are stored (in, out) — transposed relative to PyTorch — so the
    reference computes y = x @ W + b; the kernel wrapper re-orients them.
    """
    dims = [(14, 8), (8, 6), (6, 1)]
    params = []
    for fan_in, fan_out in dims:
        key, kw, kb = jax.random.split(key, 3)
        bound = 1.0 / (fan_in ** 0.5)
        w = jax.random.uniform(kw, (fan_in, fan_out), jnp.float32, -bound, bound)
        b = jax.random.uniform(kb, (1, fan_out), jnp.float32, -bound, bound)
        params += [w, b]
    return params


def ref_forward(x, params):
    w1, b1, w2, b2, w3, b3 = params
    h = jnp.maximum(x @ w1 + b1, 0.0)
    h = jnp.maximum(h @ w2 + b2, 0.0)
    return jax.nn.sigmoid(h @ w3 + b3)


if __name__ == "__main__":
    key = jax.random.PRNGKey(0)
    key, kx1, kx2 = jax.random.split(key, 3)
    params = init_params(key)

    # Case 1: tiny batch (mirrors pred() wrapping a single 14-dim vector).
    x_small = jax.random.normal(kx1, (2, 14), jnp.float32)
    out_small = mlp_forward(x_small, params)
    jax.block_until_ready(out_small)
    assert out_small.shape == (2, 1)
    assert jnp.allclose(out_small, ref_forward(x_small, params), atol=2e-2), \
        "small-batch mismatch vs reference"

    # Case 2: modest batch with an explicit small tile to exercise the
    # multi-step pipelined grid (grid = 3) and ragged-batch padding.
    x_med = jax.random.normal(kx2, (300, 14), jnp.float32)
    out_med = mlp_forward(x_med, params, tile_b=128)
    jax.block_until_ready(out_med)
    assert out_med.shape == (300, 1)
    assert jnp.allclose(out_med, ref_forward(x_med, params), atol=2e-2), \
        "medium-batch mismatch vs reference"

    print("KERNEL_OK")
</pallas_src>

<mosaic_0001>
module attributes {stable_mosaic.version = 11 : i64} {
  func.func @mlp_kernel(%arg0: i32, %arg1: memref<128x14xf32, #tpu.memory_space<vmem>>, %arg2: memref<8x14xf32, #tpu.memory_space<vmem>>, %arg3: memref<8x1xf32, #tpu.memory_space<vmem>>, %arg4: memref<6x8xf32, #tpu.memory_space<vmem>>, %arg5: memref<6x1xf32, #tpu.memory_space<vmem>>, %arg6: memref<1x6xf32, #tpu.memory_space<vmem>>, %arg7: memref<1x1xf32, #tpu.memory_space<vmem>>, %arg8: memref<1x128xf32, #tpu.memory_space<vmem>>) attributes {dimension_semantics = [#tpu.dimension_semantics<parallel>], iteration_bounds = array<i64: 1>, scalar_prefetch = 0 : i64, scratch_operands = 0 : i64, tpu.core_type = #tpu.core_type<tc>, window_params = [{transform_indices = @transform_0, window_bounds = array<i64: 128, 14>}, {pipeline_mode = #tpu.pipeline_mode<synchronous>, transform_indices = @transform_1, window_bounds = array<i64: 8, 14>}, {pipeline_mode = #tpu.pipeline_mode<synchronous>, transform_indices = @transform_2, window_bounds = array<i64: 8, 1>}, {pipeline_mode = #tpu.pipeline_mode<synchronous>, transform_indices = @transform_3, window_bounds = array<i64: 6, 8>}, {pipeline_mode = #tpu.pipeline_mode<synchronous>, transform_indices = @transform_4, window_bounds = array<i64: 6, 1>}, {pipeline_mode = #tpu.pipeline_mode<synchronous>, transform_indices = @transform_5, window_bounds = array<i64: 1, 6>}, {pipeline_mode = #tpu.pipeline_mode<synchronous>, transform_indices = @transform_6, window_bounds = array<i64: 1, 1>}, {transform_indices = @transform_7, window_bounds = array<i64: 1, 128>}]} {
    %c0 = arith.constant 0 : index
    %c0_0 = arith.constant 0 : index
    %0 = vector.load %arg1[%c0, %c0_0] : memref<128x14xf32, #tpu.memory_space<vmem>>, vector<128x14xf32>
    %1 = tpu.transpose %0, [1, 0] : vector<128x14xf32> -> vector<14x128xf32>
    %c0_1 = arith.constant 0 : index
    %c0_2 = arith.constant 0 : index
    %2 = vector.load %arg2[%c0_1, %c0_2] : memref<8x14xf32, #tpu.memory_space<vmem>>, vector<8x14xf32>
    %cst = arith.constant dense<0.000000e+00> : vector<8x128xf32>
    %3 = tpu.matmul %2, %1, %cst {dimension_numbers = #tpu.dot_dimension_numbers<[1], [0], [0], [1], [0, 0, 1, 1], [], []>} : vector<8x14xf32>, vector<14x128xf32>, vector<8x128xf32> -> vector<8x128xf32>
    %c0_3 = arith.constant 0 : index
    %c0_4 = arith.constant 0 : index
    %4 = vector.load %arg3[%c0_3, %c0_4] : memref<8x1xf32, #tpu.memory_space<vmem>>, vector<8x1xf32>
    %5 = vector.broadcast %4 : vector<8x1xf32> to vector<8x128xf32>
    %6 = arith.addf %3, %5 : vector<8x128xf32>
    %cst_5 = arith.constant 0.000000e+00 : f32
    %7 = vector.broadcast %cst_5 : f32 to vector<8x128xf32>
    %8 = arith.maximumf %6, %7 : vector<8x128xf32>
    %c0_6 = arith.constant 0 : index
    %c0_7 = arith.constant 0 : index
    %9 = vector.load %arg4[%c0_6, %c0_7] : memref<6x8xf32, #tpu.memory_space<vmem>>, vector<6x8xf32>
    %cst_8 = arith.constant dense<0.000000e+00> : vector<6x128xf32>
    %10 = tpu.matmul %9, %8, %cst_8 {dimension_numbers = #tpu.dot_dimension_numbers<[1], [0], [0], [1], [0, 0, 1, 1], [], []>} : vector<6x8xf32>, vector<8x128xf32>, vector<6x128xf32> -> vector<6x128xf32>
    %c0_9 = arith.constant 0 : index
    %c0_10 = arith.constant 0 : index
    %11 = vector.load %arg5[%c0_9, %c0_10] : memref<6x1xf32, #tpu.memory_space<vmem>>, vector<6x1xf32>
    %12 = vector.broadcast %11 : vector<6x1xf32> to vector<6x128xf32>
    %13 = arith.addf %10, %12 : vector<6x128xf32>
    %cst_11 = arith.constant 0.000000e+00 : f32
    %14 = vector.broadcast %cst_11 : f32 to vector<6x128xf32>
    %15 = arith.maximumf %13, %14 : vector<6x128xf32>
    %c0_12 = arith.constant 0 : index
    %c0_13 = arith.constant 0 : index
    %16 = vector.load %arg6[%c0_12, %c0_13] : memref<1x6xf32, #tpu.memory_space<vmem>>, vector<1x6xf32>
    %cst_14 = arith.constant dense<0.000000e+00> : vector<1x128xf32>
    %17 = tpu.matmul %16, %15, %cst_14 {dimension_numbers = #tpu.dot_dimension_numbers<[1], [0], [0], [1], [0, 0, 1, 1], [], []>} : vector<1x6xf32>, vector<6x128xf32>, vector<1x128xf32> -> vector<1x128xf32>
    %c0_15 = arith.constant 0 : index
    %c0_16 = arith.constant 0 : index
    %18 = vector.load %arg7[%c0_15, %c0_16] : memref<1x1xf32, #tpu.memory_space<vmem>>, vector<1x1xf32>
    %19 = vector.broadcast %18 : vector<1x1xf32> to vector<1x128xf32>
    %20 = arith.addf %17, %19 : vector<1x128xf32>
    %21 = arith.negf %20 : vector<1x128xf32>
    %22 = math.exp %21 : vector<1x128xf32>
    %cst_17 = arith.constant 1.000000e+00 : f32
    %23 = vector.broadcast %cst_17 : f32 to vector<1x128xf32>
    %24 = arith.addf %23, %22 : vector<1x128xf32>
    %25 = arith.divf %23, %24 : vector<1x128xf32>
    %c0_18 = arith.constant 0 : index
    %c0_19 = arith.constant 0 : index
    %26 = vector.load %arg8[%c0_18, %c0_19] : memref<1x128xf32, #tpu.memory_space<vmem>>, vector<1x128xf32>
    tpu.vector_store %arg8[%c0_18, %c0_19], %25 {strides = array<i32>} : memref<1x128xf32, #tpu.memory_space<vmem>>, vector<1x128xf32>,
    return
  }
  func.func @transform_0(%arg0: i32) -> (i32, i32) {
    %c0_i32 = arith.constant 0 : i32
    %c0_i32_0 = arith.constant 0 : i32
    return %arg0, %c0_i32 : i32, i32
  }
  func.func @transform_1(%arg0: i32) -> (i32, i32) {
    %c0_i32 = arith.constant 0 : i32
    %c0_i32_0 = arith.constant 0 : i32
    %c0_i32_1 = arith.constant 0 : i32
    return %c0_i32, %c0_i32_0 : i32, i32
  }
  func.func @transform_2(%arg0: i32) -> (i32, i32) {
    %c0_i32 = arith.constant 0 : i32
    %c0_i32_0 = arith.constant 0 : i32
    %c0_i32_1 = arith.constant 0 : i32
    return %c0_i32, %c0_i32_0 : i32, i32
  }
  func.func @transform_3(%arg0: i32) -> (i32, i32) {
    %c0_i32 = arith.constant 0 : i32
    %c0_i32_0 = arith.constant 0 : i32
    %c0_i32_1 = arith.constant 0 : i32
    return %c0_i32, %c0_i32_0 : i32, i32
  }
  func.func @transform_4(%arg0: i32) -> (i32, i32) {
    %c0_i32 = arith.constant 0 : i32
    %c0_i32_0 = arith.constant 0 : i32
    %c0_i32_1 = arith.constant 0 : i32
    return %c0_i32, %c0_i32_0 : i32, i32
  }
  func.func @transform_5(%arg0: i32) -> (i32, i32) {
    %c0_i32 = arith.constant 0 : i32
    %c0_i32_0 = arith.constant 0 : i32
    %c0_i32_1 = arith.constant 0 : i32
    return %c0_i32, %c0_i32_0 : i32, i32
  }
  func.func @transform_6(%arg0: i32) -> (i32, i32) {
    %c0_i32 = arith.constant 0 : i32
    %c0_i32_0 = arith.constant 0 : i32
    %c0_i32_1 = arith.constant 0 : i32
    return %c0_i32, %c0_i32_0 : i32, i32
  }
  func.func @transform_7(%arg0: i32) -> (i32, i32) {
    %c0_i32 = arith.constant 0 : i32
    %c0_i32_0 = arith.constant 0 : i32
    return %c0_i32, %arg0 : i32, i32
  }
}

</mosaic_0001>

<llo_original>
// kernel: tpu_custom_call.1
$region0: #{tpu_custom_call.1}
  #allocation0 [shape = 'u32[]', space=smem, size = 0x4, offset = 0x4, fixed_abs, tag = 'smem constant byte address 0x4 - core index']
  #allocation1 [shape = 'u32[144,128]{1,0:T(1,128)}', space=vmem, size = 0x12000, scoped, tag = 'internal scratch']
  #allocation2 [shape = 'f32[1,1]{1,0:T(1,128)S(1)}', space=vmem, size = 0x200, scoped, tag = 'scoped memory for tpu_custom_call.1']
  %s0 = inlined_call_operand.vmem [shape: f32[128,14], index: 0, kind: input, shape index: {}]
  %s1 = inlined_call_operand.vmem [shape: f32[8,14], index: 1, kind: input, shape index: {}]
  %s2 = inlined_call_operand.vmem [shape: f32[8,1], index: 2, kind: input, shape index: {}]
  %s3 = inlined_call_operand.vmem [shape: f32[6,8], index: 3, kind: input, shape index: {}]
  %s4 = inlined_call_operand.vmem [shape: f32[6,1], index: 4, kind: input, shape index: {}]
  %s5 = inlined_call_operand.vmem [shape: f32[1,6], index: 5, kind: input, shape index: {}]
  %s6 = inlined_call_operand.<no memory space> [shape: f32[1,1], index: 6, kind: input, shape index: {}]
  %s7 = inlined_call_operand.hbm [shape: f32[1,128], index: 7, kind: output, shape index: {}]
  %s8 = sld [smem:[#allocation0]]
  $region38: #{tpu_custom_call.1} parent=0
    _
  %s10 = ssub.s32 1, %s8
  %s11 = scalar_select 0, %s10, %s8
  %v12 = vstv %s6
  %13 = vst [vmem:[#allocation2] sm:$0x1] %v12
  $region1: #{tpu_custom_call.1} parent=0
    #allocation3 [shape = 'u8[512]{0}', space=vmem, size = 0x400, scoped, tag = 'output window, operand 0, single buffered']
    #allocation4 [shape = 's32[1]{0}', space=sflag, size = 0x4, scoped, tag = 'scoped memory for tpu_custom_call.1']
    %14 = vsyncpa [#allocation4], 0
    // Predicated region
    $region2: #{tpu_custom_call.1} parent=1 // pred_check
      _
    $region3: #{tpu_custom_call.1} parent=1 // pred_check_branch
      %16 = sbr.rel (0) target = $region5
    $region4: #{tpu_custom_call.1} parent=1 // pred_region
      _
    $region5: #{tpu_custom_call.1} parent=1 // pred_fallthru
      _
    // Predicated region
    $region6: #{tpu_custom_call.1} parent=1 // pred_check
      _
    $region7: #{tpu_custom_call.1} parent=1 // pred_check_branch
      %18 = sbr.rel (0) target = $region9
    $region8: #{tpu_custom_call.1} parent=1 // pred_region
      _
    $region9: #{tpu_custom_call.1} parent=1 // pred_fallthru
      _
    // Predicated region
    $region10: #{tpu_custom_call.1} parent=1 // pred_check
      _
    $region11: #{tpu_custom_call.1} parent=1 // pred_check_branch
      %20 = sbr.rel (0) target = $region13
    $region12: #{tpu_custom_call.1} parent=1 // pred_region
      _
    $region13: #{tpu_custom_call.1} parent=1 // pred_fallthru
      _
    // Predicated region
    $region14: #{tpu_custom_call.1} parent=1 // pred_check
      _
    $region15: #{tpu_custom_call.1} parent=1 // pred_check_branch
      %22 = sbr.rel (0) target = $region17
    $region16: #{tpu_custom_call.1} parent=1 // pred_region
      _
    $region17: #{tpu_custom_call.1} parent=1 // pred_fallthru
      _
    // Predicated region
    $region18: #{tpu_custom_call.1} parent=1 // pred_check
      _
    $region19: #{tpu_custom_call.1} parent=1 // pred_check_branch
      %24 = sbr.rel (0) target = $region21
    $region20: #{tpu_custom_call.1} parent=1 // pred_region
      _
    $region21: #{tpu_custom_call.1} parent=1 // pred_fallthru
      _
    // Predicated region
    $region22: #{tpu_custom_call.1} parent=1 // pred_check
      _
    $region23: #{tpu_custom_call.1} parent=1 // pred_check_branch
      %26 = sbr.rel (0) target = $region25
    $region24: #{tpu_custom_call.1} parent=1 // pred_region
      _
    $region25: #{tpu_custom_call.1} parent=1 // pred_fallthru
      _
    // Predicated region
    $region26: #{tpu_custom_call.1} parent=1 // pred_check
      _
    $region27: #{tpu_custom_call.1} parent=1 // pred_check_branch
      %28 = sbr.rel (0) target = $region29
    $region28: #{tpu_custom_call.1} parent=1 // pred_region
      _
    $region29: #{tpu_custom_call.1} parent=1 // pred_fallthru
      _
    %v29 = vld [vmem:[%s0] sm:$0xff]
    %v30 = vld [vmem:[%s0 + $0x8] sm:$0xff]
    %v31 = vld [vmem:[%s0 + $0x10] sm:$0xff]
    %v32 = vld [vmem:[%s0 + $0x18] sm:$0xff]
    %v33 = vld [vmem:[%s0 + $0x20] sm:$0xff]
    %v34 = vld [vmem:[%s0 + $0x28] sm:$0xff]
    %v35 = vld [vmem:[%s0 + $0x30] sm:$0xff]
    %v36 = vld [vmem:[%s0 + $0x38] sm:$0xff]
    %v37 = vld [vmem:[%s0 + $0x40] sm:$0xff]
    %v38 = vld [vmem:[%s0 + $0x48] sm:$0xff]
    %v39 = vld [vmem:[%s0 + $0x50] sm:$0xff]
    %v40 = vld [vmem:[%s0 + $0x58] sm:$0xff]
    %v41 = vld [vmem:[%s0 + $0x60] sm:$0xff]
    %v42 = vld [vmem:[%s0 + $0x68] sm:$0xff]
    %v43 = vld [vmem:[%s0 + $0x70] sm:$0xff]
    %v44 = vld [vmem:[%s0 + $0x78] sm:$0xff]
    %v45 = vld [vmem:[%s1] sm:$0xff]
    %v46 = vld [vmem:[%s2] sm:$0xff]
    %48 = vset.pattern.permute.xlu0 0
    %49 = vperm.xlu0 %48, %v46
    %v50 = vpop.permute.xlu0 %49
    %vm52 = vcmask 113664
    %v54 = vsel %vm52, %v45, 0
    %v57 = vsel %vm52, %v29, 0
    %v60 = vsel %vm52, %v30, 0
    %v63 = vsel %vm52, %v31, 0
    %v66 = vsel %vm52, %v32, 0
    %v69 = vsel %vm52, %v33, 0
    %v72 = vsel %vm52, %v34, 0
    %v75 = vsel %vm52, %v35, 0
    %v78 = vsel %vm52, %v36, 0
    %v81 = vsel %vm52, %v37, 0
    %v84 = vsel %vm52, %v38, 0
    %v87 = vsel %vm52, %v39, 0
    %v90 = vsel %vm52, %v40, 0
    %v93 = vsel %vm52, %v41, 0
    %v96 = vsel %vm52, %v42, 0
    %v99 = vsel %vm52, %v43, 0
    %v102 = vsel %vm52, %v44, 0
    %104 = vmatprep.subr.mxu0 0.0
    %105 = vmatpush1.xpose.msra.mxu0 %v102
    %106 = vmatprep.subr.mxu0 0.0
    %107 = vmatpush1.xpose.msra.mxu0 %v99
    %108 = vmatprep.subr.mxu0 0.0
    %109 = vmatpush1.xpose.msra.mxu0 %v96
    %110 = vmatprep.subr.mxu0 0.0
    %111 = vmatpush1.xpose.msra.mxu0 %v93
    %112 = vmatprep.subr.mxu0 0.0
    %113 = vmatpush1.xpose.msra.mxu0 %v90
    %114 = vmatprep.subr.mxu0 0.0
    %115 = vmatpush1.xpose.msra.mxu0 %v87
    %116 = vmatprep.subr.mxu0 0.0
    %117 = vmatpush1.xpose.msra.mxu0 %v84
    %118 = vmatprep.subr.mxu0 0.0
    %119 = vmatpush1.xpose.msra.mxu0 %v81
    %120 = vmatprep.subr.mxu0 0.0
    %121 = vmatpush1.xpose.msra.mxu0 %v78
    %122 = vmatprep.subr.mxu0 0.0
    %123 = vmatpush1.xpose.msra.mxu0 %v75
    %124 = vmatprep.subr.mxu0 0.0
    %125 = vmatpush1.xpose.msra.mxu0 %v72
    %126 = vmatprep.subr.mxu0 0.0
    %127 = vmatpush1.xpose.msra.mxu0 %v69
    %128 = vmatprep.subr.mxu0 0.0
    %129 = vmatpush1.xpose.msra.mxu0 %v66
    %130 = vmatprep.subr.mxu0 0.0
    %131 = vmatpush1.xpose.msra.mxu0 %v63
    %132 = vmatprep.subr.mxu0 0.0
    %133 = vmatpush1.xpose.msra.mxu0 %v60
    %134 = vmatprep.subr.mxu0 0.0
    %135 = vmatpush1.xpose.msra.mxu0 %v57
    %136 = vmatprep.subr.mxu0 0.0
    %137 = vmatpush2.xpose.msra.mxu0 0.0
    %138 = vmatprep.subr.mxu0 0.0
    %139 = vmatpush2.xpose.msra.mxu0 0.0
    %140 = vmatprep.subr.mxu0 0.0
    %141 = vmatpush2.xpose.msra.mxu0 0.0
    %142 = vmatprep.subr.mxu0 0.0
    %143 = vmatpush2.xpose.msra.mxu0 0.0
    %144 = vmatprep.subr.mxu0 0.0
    %145 = vmatpush2.xpose.msra.mxu0 0.0
    %146 = vmatprep.subr.mxu0 0.0
    %147 = vmatpush2.xpose.msra.mxu0 0.0
    %148 = vmatprep.subr.mxu0 0.0
    %149 = vmatpush2.xpose.msra.mxu0 0.0
    %150 = vmatprep.subr.mxu0 0.0
    %151 = vmatpush2.xpose.msra.mxu0 0.0
    %152 = vmatprep.subr.mxu0 0.0
    %153 = vmatpush2.xpose.msra.mxu0 0.0
    %154 = vmatprep.subr.mxu0 0.0
    %155 = vmatpush2.xpose.msra.mxu0 0.0
    %156 = vmatprep.subr.mxu0 0.0
    %157 = vmatpush2.xpose.msra.mxu0 0.0
    %158 = vmatprep.subr.mxu0 0.0
    %159 = vmatpush2.xpose.msra.mxu0 0.0
    %160 = vmatprep.subr.mxu0 0.0
    %161 = vmatpush2.xpose.msra.mxu0 0.0
    %162 = vmatprep.subr.mxu0 0.0
    %163 = vmatpush2.xpose.msra.mxu0 0.0
    %164 = vmatprep.subr.mxu0 0.0
    %165 = vmatpush2.xpose.msra.mxu0 0.0
    %166 = vmatprep.subr.mxu0 0.0
    %167 = vmatpush2.xpose.msra.mxu0 0.0
    %168 = vmatprep.mubr.f32.mxu0 0.0
    %169 = vmatmul.mubr.f32.gmra.mxu0 %v54
    %v170 = vpop.f32.mrf.mxu0
    %v171 = vadd.f32 %v50, %v170
    %v172 = vpop.f32.mrf.mxu0
    %173 = vdwg.mxu0
    %v174 = vmax.f32 %v171, 0.0
    %v175 = vld [vmem:[%s3] sm:$0x3f]
    %v176 = vld [vmem:[%s4] sm:$0x3f]
    %178 = vset.pattern.permute.xlu0 0
    %179 = vperm.xlu0 %178, %v176
    %v180 = vpop.permute.xlu0 %179
    %vm182 = vcmask 64512
    %v184 = vsel %vm182, %v175, 0
    %186 = vmatprep.subr.mxu0 0.0
    %187 = vmatpush1.msra.mxu0 0.0
    %188 = vmatprep.subr.mxu0 0.0
    %189 = vmatpush1.msra.mxu0 0.0
    %190 = vmatprep.subr.mxu0 0.0
    %191 = vmatpush1.msra.mxu0 0.0
    %192 = vmatprep.subr.mxu0 0.0
    %193 = vmatpush1.msra.mxu0 0.0
    %194 = vmatprep.subr.mxu0 0.0
    %195 = vmatpush1.msra.mxu0 0.0
    %196 = vmatprep.subr.mxu0 0.0
    %197 = vmatpush1.msra.mxu0 0.0
    %198 = vmatprep.subr.mxu0 0.0
    %199 = vmatpush1.msra.mxu0 0.0
    %200 = vmatprep.subr.mxu0 0.0
    %201 = vmatpush1.msra.mxu0 0.0
    %202 = vmatprep.subr.mxu0 0.0
    %203 = vmatpush1.msra.mxu0 0.0
    %204 = vmatprep.subr.mxu0 0.0
    %205 = vmatpush1.msra.mxu0 0.0
    %206 = vmatprep.subr.mxu0 0.0
    %207 = vmatpush1.msra.mxu0 0.0
    %208 = vmatprep.subr.mxu0 0.0
    %209 = vmatpush1.msra.mxu0 0.0
    %210 = vmatprep.subr.mxu0 0.0
    %211 = vmatpush1.msra.mxu0 0.0
    %212 = vmatprep.subr.mxu0 0.0
    %213 = vmatpush1.msra.mxu0 0.0
    %214 = vmatprep.subr.mxu0 0.0
    %215 = vmatpush1.msra.mxu0 0.0
    %216 = vmatprep.subr.mxu0 0.0
    %217 = vmatpush1.msra.mxu0 %v174
    %218 = vmatprep.subr.mxu0 0.0
    %219 = vmatpush2.msra.mxu0 0.0
    %220 = vmatprep.subr.mxu0 0.0
    %221 = vmatpush2.msra.mxu0 0.0
    %222 = vmatprep.subr.mxu0 0.0
    %223 = vmatpush2.msra.mxu0 0.0
    %224 = vmatprep.subr.mxu0 0.0
    %225 = vmatpush2.msra.mxu0 0.0
    %226 = vmatprep.subr.mxu0 0.0
    %227 = vmatpush2.msra.mxu0 0.0
    %228 = vmatprep.subr.mxu0 0.0
    %229 = vmatpush2.msra.mxu0 0.0
    %230 = vmatprep.subr.mxu0 0.0
    %231 = vmatpush2.msra.mxu0 0.0
    %232 = vmatprep.subr.mxu0 0.0
    %233 = vmatpush2.msra.mxu0 0.0
    %234 = vmatprep.subr.mxu0 0.0
    %235 = vmatpush2.msra.mxu0 0.0
    %236 = vmatprep.subr.mxu0 0.0
    %237 = vmatpush2.msra.mxu0 0.0
    %238 = vmatprep.subr.mxu0 0.0
    %239 = vmatpush2.msra.mxu0 0.0
    %240 = vmatprep.subr.mxu0 0.0
    %241 = vmatpush2.msra.mxu0 0.0
    %242 = vmatprep.subr.mxu0 0.0
    %243 = vmatpush2.msra.mxu0 0.0
    %244 = vmatprep.subr.mxu0 0.0
    %245 = vmatpush2.msra.mxu0 0.0
    %246 = vmatprep.subr.mxu0 0.0
    %247 = vmatpush2.msra.mxu0 0.0
    %248 = vmatprep.subr.mxu0 0.0
    %249 = vmatpush2.msra.mxu0 0.0
    %250 = vmatprep.mubr.f32.mxu0 0.0
    %251 = vmatmul.mubr.f32.gmra.mxu0 %v184
    %v252 = vpop.f32.mrf.mxu0
    %v253 = vadd.f32 %v180, %v252
    %v254 = vpop.f32.mrf.mxu0
    %255 = vdwg.mxu0
    %v256 = vmax.f32 %v253, 0.0
    %v257 = vld [vmem:[%s5] sm:$0x1]
    %v258 = vld [vmem:[#allocation2] sm:$0x1]
    %260 = vset.pattern.permute.xlu0 0
    %261 = vperm.xlu0 %260, %v258
    %v262 = vpop.permute.xlu0 %261
    %v264 = vlaneseq
    %v265 = vshrl.u32 %v264, 7
    %v266 = vsub.s32 0, %v265
    %v267 = vrot.slane %v262, %v266
    %vm268 = vcmask 48128
    %v270 = vsel %vm268, %v257, 0
    %vm272 = vcmask 1045504
    %v274 = vsel %vm272, %v256, 0
    %276 = vmatprep.subr.mxu0 0.0
    %277 = vmatpush1.msra.mxu0 0.0
    %278 = vmatprep.subr.mxu0 0.0
    %279 = vmatpush1.msra.mxu0 0.0
    %280 = vmatprep.subr.mxu0 0.0
    %281 = vmatpush1.msra.mxu0 0.0
    %282 = vmatprep.subr.mxu0 0.0
    %283 = vmatpush1.msra.mxu0 0.0
    %284 = vmatprep.subr.mxu0 0.0
    %285 = vmatpush1.msra.mxu0 0.0
    %286 = vmatprep.subr.mxu0 0.0
    %287 = vmatpush1.msra.mxu0 0.0
    %288 = vmatprep.subr.mxu0 0.0
    %289 = vmatpush1.msra.mxu0 0.0
    %290 = vmatprep.subr.mxu0 0.0
    %291 = vmatpush1.msra.mxu0 0.0
    %292 = vmatprep.subr.mxu0 0.0
    %293 = vmatpush1.msra.mxu0 0.0
    %294 = vmatprep.subr.mxu0 0.0
    %295 = vmatpush1.msra.mxu0 0.0
    %296 = vmatprep.subr.mxu0 0.0
    %297 = vmatpush1.msra.mxu0 0.0
    %298 = vmatprep.subr.mxu0 0.0
    %299 = vmatpush1.msra.mxu0 0.0
    %300 = vmatprep.subr.mxu0 0.0
    %301 = vmatpush1.msra.mxu0 0.0
    %302 = vmatprep.subr.mxu0 0.0
    %303 = vmatpush1.msra.mxu0 0.0
    %304 = vmatprep.subr.mxu0 0.0
    %305 = vmatpush1.msra.mxu0 0.0
    %306 = vmatprep.subr.mxu0 0.0
    %307 = vmatpush1.msra.mxu0 %v274
    %308 = vmatprep.subr.mxu0 0.0
    %309 = vmatpush2.msra.mxu0 0.0
    %310 = vmatprep.subr.mxu0 0.0
    %311 = vmatpush2.msra.mxu0 0.0
    %312 = vmatprep.subr.mxu0 0.0
    %313 = vmatpush2.msra.mxu0 0.0
    %314 = vmatprep.subr.mxu0 0.0
    %315 = vmatpush2.msra.mxu0 0.0
    %316 = vmatprep.subr.mxu0 0.0
    %317 = vmatpush2.msra.mxu0 0.0
    %318 = vmatprep.subr.mxu0 0.0
    %319 = vmatpush2.msra.mxu0 0.0
    %320 = vmatprep.subr.mxu0 0.0
    %321 = vmatpush2.msra.mxu0 0.0
    %322 = vmatprep.subr.mxu0 0.0
    %323 = vmatpush2.msra.mxu0 0.0
    %324 = vmatprep.subr.mxu0 0.0
    %325 = vmatpush2.msra.mxu0 0.0
    %326 = vmatprep.subr.mxu0 0.0
    %327 = vmatpush2.msra.mxu0 0.0
    %328 = vmatprep.subr.mxu0 0.0
    %329 = vmatpush2.msra.mxu0 0.0
    %330 = vmatprep.subr.mxu0 0.0
    %331 = vmatpush2.msra.mxu0 0.0
    %332 = vmatprep.subr.mxu0 0.0
    %333 = vmatpush2.msra.mxu0 0.0
    %334 = vmatprep.subr.mxu0 0.0
    %335 = vmatpush2.msra.mxu0 0.0
    %336 = vmatprep.subr.mxu0 0.0
    %337 = vmatpush2.msra.mxu0 0.0
    %338 = vmatprep.subr.mxu0 0.0
    %339 = vmatpush2.msra.mxu0 0.0
    %340 = vmatprep.mubr.f32.mxu0 0.0
    %341 = vmatmul.mubr.f32.gmra.mxu0 %v270
    %v342 = vpop.f32.mrf.mxu0
    %v343 = vadd.f32 %v267, %v342
    %v344 = vpop.f32.mrf.mxu0
    %345 = vdwg.mxu0
    %v346 = vxor.u32 %v343, 2147483648
    %v347 = vmul.f32 %v346, 1.442695
    %v348 = vpow.pop %v347
    %v349 = vadd.f32 %v348, 1.0
    %v350 = vrcp.pop %v349
    %v351 = vmul.f32 1.0, %v350
    %352 = vst [vmem:[#allocation3] sm:$0x1] %v351
    // Predicated region
    $region30: #{tpu_custom_call.1} parent=1 // pred_check
      _
    $region31: #{tpu_custom_call.1} parent=1 // pred_check_branch
      %354 = sbr.rel (0) target = $region33
    $region32: #{tpu_custom_call.1} parent=1 // pred_region
      %s356 = ssub.s32 16, 16
      %357 = vsyncadd [#allocation4], %s356
      %s359 = sshll.u32 [#allocation3], 4
      %s360 = int_to_ptr.vmem [resolvable:$true] %s359
      %362 = dma.vmem_to_hbm [thread:$0]  %s360, 16, %s7, [#allocation4]
    $region33: #{tpu_custom_call.1} parent=1 // pred_fallthru
      _
    // Predicated region
    $region34: #{tpu_custom_call.1} parent=1 // pred_check
      _
    $region35: #{tpu_custom_call.1} parent=1 // pred_check_branch
      %364 = sbr.rel (0) target = $region37
    $region36: #{tpu_custom_call.1} parent=1 // pred_region
      %365 = dma.done [#allocation4], 16
    $region37: #{tpu_custom_call.1} parent=1 // pred_fallthru
      _
    %366 = vsyncpa [#allocation4], 1

</llo_original>
